<compile_context>
chip_gen: v6e
topology: v6e:2x2x1
jax: 0.10.0
libtpu: 0.0.40
codegen_flags: <defaults>
</compile_context>

<pallas_src>
import jax
import jax.numpy as jnp
from jax.experimental import pallas as pl
from jax.experimental.pallas import tpu as pltpu

# --- model dimensions (small, consistent with the module) -------------------
BATCH = 8
STATE_DIM = 16
ACTION_SIZE = 5
REWARD_DIM = 4
NB_CHANNELS = 32
LATENT_DIM = 32
HIST_DIM = 32
GATES = 4 * HIST_DIM                                 # 128

IN1 = STATE_DIM + ACTION_SIZE + REWARD_DIM           # 25
IN_PAD = 32                                          # encoder input padded to 32 lanes

# --- single lane-dense weight slab [SLAB_ROWS, 128], 8-aligned row offsets ---
W1_OFF = 0       # rows   0..31  : w1   [IN1,NB]     zero-padded to [32,128]
W2_OFF = 32      # rows  32..159 : w2   [NB,LATENT]  zero-padded to [128,128]
WIH_OFF = 160    # rows 160..287 : w_ih [LATENT,4H]  zero-padded to [128,128]
WHH_OFF = 288    # rows 288..319 : w_hh [HIST,4H]
B1_ROW = 320     # b1 (cols 0..31)
B2_ROW = 321     # b2 (cols 0..31)
BL_ROW = 322     # b_ih + b_hh pre-summed (all 128 cols)
SLAB_ROWS = 328
SLAB_COLS = 128


def hist_encoder_seq_kernel(x_ref, hc0_ref, w_ref, hist_ref, c_out_ref,
                            h_scr, c_scr):
    """One grid step = one timestep of the recurrence; h/c live in VMEM scratch."""
    f32 = jnp.float32
    H = HIST_DIM
    t = pl.program_id(0)

    @pl.when(t == 0)
    def _():
        h_scr[...] = hc0_ref[0]
        c_scr[...] = hc0_ref[1]

    x = x_ref[...]                      # [B, 32]  (state | action | reward | 0-pad)
    h_prev = h_scr[...]                 # [B, H]
    c_prev = c_scr[...]                 # [B, H]

    # static sub-views of the packed weight slab (all 128 lanes wide)
    w1 = w_ref[W1_OFF:W1_OFF + IN_PAD, :]            # [32, 128]
    w2 = w_ref[W2_OFF:W2_OFF + SLAB_COLS, :]         # [128,128] (rows 32.. zero)
    wih = w_ref[WIH_OFF:WIH_OFF + SLAB_COLS, :]      # [128,128] (rows 32.. zero)
    whh = w_ref[WHH_OFF:WHH_OFF + HIST_DIM, :]       # [32, 128]
    b1 = w_ref[B1_ROW:B1_ROW + 1, :]                 # [1, 128]
    b2 = w_ref[B2_ROW:B2_ROW + 1, :]                 # [1, 128]
    bl = w_ref[BL_ROW:BL_ROW + 1, :]                 # [1, 128]

    # StateActionRewardEncoder stub: 2-layer MLP with ReLU (lane-padded; the
    # padded lanes stay exactly zero because the padded weight rows/cols are 0).
    hdn = jnp.maximum(jnp.dot(x, w1, preferred_element_type=f32) + b1, 0.0)
    feat = jnp.maximum(jnp.dot(hdn, w2, preferred_element_type=f32) + b2, 0.0)

    # MindTracker stub: LSTM cell.  Two K<=128 pushes against the same slab,
    # no concatenated operand, bias pre-summed.
    gates = (jnp.dot(feat, wih, preferred_element_type=f32)
             + jnp.dot(h_prev, whh, preferred_element_type=f32) + bl)   # [B, 4H]

    # activations once over the full [B,128] tile, then static H-slices
    sg = jax.nn.sigmoid(gates)
    th = jnp.tanh(gates)
    i_g = sg[:, 0 * H:1 * H]
    f_g = sg[:, 1 * H:2 * H]
    g_g = th[:, 2 * H:3 * H]
    o_g = sg[:, 3 * H:4 * H]

    c_new = f_g * c_prev + i_g * g_g
    h_new = o_g * jnp.tanh(c_new)

    h_scr[...] = h_new
    c_scr[...] = c_new
    hist_ref[...] = h_new               # per-step hist_mind (only T-blocked output)

    @pl.when(t == pl.num_programs(0) - 1)
    def _():
        c_out_ref[...] = c_new          # final cell state, written once


def hist_encoder_sequence(reward_seq, state_seq, action_seq, hidden_state, w_slab):
    """Fused T-step HistEncoder: one pallas_call, weights DMA'd once,
    hidden state resident in VMEM across all timesteps."""
    T, B = state_seq.shape[0], state_seq.shape[1]

    # glue (plain JAX): concat encoder input and pad 25 -> 32 lanes
    x = jnp.concatenate([state_seq, action_seq, reward_seq], axis=-1)   # [T,B,25]
    x = jnp.pad(x, ((0, 0), (0, 0), (0, IN_PAD - IN1)))                 # [T,B,32]

    if hidden_state is None:
        h0 = jnp.zeros((B, HIST_DIM), jnp.float32)
        c0 = jnp.zeros((B, HIST_DIM), jnp.float32)
    else:
        h0, c0 = hidden_state
    hc0 = jnp.stack([h0, c0], axis=0)                                   # [2,B,H]

    hist_seq, c_last = pl.pallas_call(
        hist_encoder_seq_kernel,
        grid=(T,),
        in_specs=[
            pl.BlockSpec((None, B, IN_PAD), lambda t: (t, 0, 0)),        # per-step x
            pl.BlockSpec((2, B, HIST_DIM), lambda t: (0, 0, 0)),         # initial (h,c)
            pl.BlockSpec((SLAB_ROWS, SLAB_COLS), lambda t: (0, 0)),      # weight slab
        ],
        out_specs=(
            pl.BlockSpec((None, B, HIST_DIM), lambda t: (t, 0, 0)),      # hist per step
            pl.BlockSpec((B, HIST_DIM), lambda t: (0, 0)),               # final c
        ),
        out_shape=(
            jax.ShapeDtypeStruct((T, B, HIST_DIM), jnp.float32),
            jax.ShapeDtypeStruct((B, HIST_DIM), jnp.float32),
        ),
        scratch_shapes=[
            pltpu.VMEM((B, HIST_DIM), jnp.float32),    # h carry
            pltpu.VMEM((B, HIST_DIM), jnp.float32),    # c carry
        ],
        compiler_params=pltpu.CompilerParams(
            dimension_semantics=("arbitrary",)),       # time axis is a recurrence
    )(x, hc0, w_slab)

    # hidden_state = (h_T, c_T); h_T is just the last hist step (no duplicate store)
    return hist_seq, (hist_seq[-1], c_last)


def hist_encoder(received_reward_2d, cur_state, action_2d, hidden_state, w_slab):
    """Mirrors HistEncoder.forward(received_reward_2d, cur_state, action_2d, h)."""
    hist_seq, hidden = hist_encoder_sequence(
        received_reward_2d[None], cur_state[None], action_2d[None],
        hidden_state, w_slab)
    return hist_seq[0], hidden


def init_params(key):
    """PyTorch-Linear/LSTMCell-style uniform(-1/sqrt(fan)) init + slab packing."""
    def uni(k, shape, fan):
        s = 1.0 / jnp.sqrt(jnp.float32(fan))
        return jax.random.uniform(k, shape, jnp.float32, -s, s)

    ks = jax.random.split(key, 8)
    w1 = uni(ks[0], (IN1, NB_CHANNELS), IN1)
    b1 = uni(ks[1], (NB_CHANNELS,), IN1)
    w2 = uni(ks[2], (NB_CHANNELS, LATENT_DIM), NB_CHANNELS)
    b2 = uni(ks[3], (LATENT_DIM,), NB_CHANNELS)
    w_ih = uni(ks[4], (LATENT_DIM, GATES), HIST_DIM)
    w_hh = uni(ks[5], (HIST_DIM, GATES), HIST_DIM)
    b_ih = uni(ks[6], (GATES,), HIST_DIM)
    b_hh = uni(ks[7], (GATES,), HIST_DIM)

    slab = jnp.zeros((SLAB_ROWS, SLAB_COLS), jnp.float32)
    slab = slab.at[W1_OFF:W1_OFF + IN1, :NB_CHANNELS].set(w1)
    slab = slab.at[W2_OFF:W2_OFF + NB_CHANNELS, :LATENT_DIM].set(w2)
    slab = slab.at[WIH_OFF:WIH_OFF + LATENT_DIM, :GATES].set(w_ih)
    slab = slab.at[WHH_OFF:WHH_OFF + HIST_DIM, :GATES].set(w_hh)
    slab = slab.at[B1_ROW, :NB_CHANNELS].set(b1)
    slab = slab.at[B2_ROW, :LATENT_DIM].set(b2)
    slab = slab.at[BL_ROW, :GATES].set(b_ih + b_hh)

    raw = dict(w1=w1, b1=b1, w2=w2, b2=b2,
               w_ih=w_ih, w_hh=w_hh, b_ih=b_ih, b_hh=b_hh)
    return raw, slab


def reference_step(x25, h, c, raw):
    """Pure-JAX reference of one HistEncoder step (same stub math)."""
    hdn = jax.nn.relu(x25 @ raw['w1'] + raw['b1'])
    feat = jax.nn.relu(hdn @ raw['w2'] + raw['b2'])
    gates = feat @ raw['w_ih'] + h @ raw['w_hh'] + raw['b_ih'] + raw['b_hh']
    i, f, g, o = jnp.split(gates, 4, axis=-1)
    c_new = jax.nn.sigmoid(f) * c + jax.nn.sigmoid(i) * jnp.tanh(g)
    h_new = jax.nn.sigmoid(o) * jnp.tanh(c_new)
    return h_new, c_new


if __name__ == "__main__":
    key = jax.random.PRNGKey(0)
    k_r, k_s, k_a, k_p = jax.random.split(key, 4)

    T = 6
    reward_seq = jax.random.normal(k_r, (T, BATCH, REWARD_DIM), jnp.float32)
    state_seq = jax.random.normal(k_s, (T, BATCH, STATE_DIM), jnp.float32)
    action_seq = jax.random.normal(k_a, (T, BATCH, ACTION_SIZE), jnp.float32)
    raw, w_slab = init_params(k_p)

    # --- fused-sequence path (the structural optimization) -------------------
    seq_fn = jax.jit(hist_encoder_sequence)
    hist_seq, (h_T, c_T) = seq_fn(reward_seq, state_seq, action_seq, None, w_slab)
    jax.block_until_ready((hist_seq, h_T, c_T))

    # pure-JAX reference scan
    h = jnp.zeros((BATCH, HIST_DIM), jnp.float32)
    c = jnp.zeros((BATCH, HIST_DIM), jnp.float32)
    ref_hist = []
    for t in range(T):
        x25 = jnp.concatenate([state_seq[t], action_seq[t], reward_seq[t]], axis=-1)
        h, c = reference_step(x25, h, c, raw)
        ref_hist.append(h)
    ref_hist = jnp.stack(ref_hist, axis=0)

    assert hist_seq.shape == (T, BATCH, HIST_DIM)
    assert h_T.shape == (BATCH, HIST_DIM) and c_T.shape == (BATCH, HIST_DIM)
    assert jnp.allclose(hist_seq, ref_hist, atol=1e-5)
    assert jnp.allclose(h_T, ref_hist[-1], atol=1e-5)
    assert jnp.allclose(c_T, c, atol=1e-5)

    # --- single-step path (original forward signature), recurrent feed -------
    step_fn = jax.jit(hist_encoder)
    hist1, hid1 = step_fn(reward_seq[0], state_seq[0], action_seq[0], None, w_slab)
    hist2, hid2 = step_fn(reward_seq[1], state_seq[1], action_seq[1], hid1, w_slab)
    jax.block_until_ready((hist2, hid2[0], hid2[1]))

    assert hist1.shape == (BATCH, HIST_DIM)
    assert jnp.allclose(hist1, ref_hist[0], atol=1e-5)
    assert jnp.allclose(hist2, ref_hist[1], atol=1e-5)
    assert jnp.allclose(hid2[1], reference_step(
        jnp.concatenate([state_seq[1], action_seq[1], reward_seq[1]], axis=-1),
        ref_hist[0],
        reference_step(jnp.concatenate(
            [state_seq[0], action_seq[0], reward_seq[0]], axis=-1),
            jnp.zeros((BATCH, HIST_DIM)), jnp.zeros((BATCH, HIST_DIM)), raw)[1],
        raw)[1], atol=1e-5)

    print("KERNEL_OK")
</pallas_src>

<mosaic_0001>
module attributes {stable_mosaic.version = 11 : i64} {
  func.func @hist_encoder_seq_kernel(%arg0: i32, %arg1: memref<1x8x32xf32, #tpu.memory_space<vmem>>, %arg2: memref<2x8x32xf32, #tpu.memory_space<vmem>>, %arg3: memref<328x128xf32, #tpu.memory_space<vmem>>, %arg4: memref<1x8x32xf32, #tpu.memory_space<vmem>>, %arg5: memref<8x32xf32, #tpu.memory_space<vmem>>, %arg6: memref<8x32xf32, #tpu.memory_space<vmem>>, %arg7: memref<8x32xf32, #tpu.memory_space<vmem>>) attributes {dimension_semantics = [#tpu.dimension_semantics<arbitrary>], iteration_bounds = array<i64: 6>, scalar_prefetch = 0 : i64, scratch_operands = 2 : i64, tpu.core_type = #tpu.core_type<tc>, window_params = [{transform_indices = @transform_0, window_bounds = array<i64: 1, 8, 32>}, {pipeline_mode = #tpu.pipeline_mode<synchronous>, transform_indices = @transform_1, window_bounds = array<i64: 2, 8, 32>}, {pipeline_mode = #tpu.pipeline_mode<synchronous>, transform_indices = @transform_2, window_bounds = array<i64: 328, 128>}, {transform_indices = @transform_3, window_bounds = array<i64: 1, 8, 32>}, {pipeline_mode = #tpu.pipeline_mode<synchronous>, transform_indices = @transform_4, window_bounds = array<i64: 8, 32>}]} {
    %c0_i32 = arith.constant 0 : i32
    %0 = arith.cmpi eq, %arg0, %c0_i32 : i32
    %1 = arith.extui %0 : i1 to i32
    %c0_i32_0 = arith.constant 0 : i32
    %2 = arith.cmpi ne, %1, %c0_i32_0 : i32
    scf.if %2 {
      %c0_29 = arith.constant 0 : index
      %c0_30 = arith.constant 0 : index
      %c0_31 = arith.constant 0 : index
      %52 = vector.load %arg2[%c0_29, %c0_30, %c0_31] : memref<2x8x32xf32, #tpu.memory_space<vmem>>, vector<1x8x32xf32>
      %53 = vector.shape_cast %52 : vector<1x8x32xf32> to vector<8x32xf32>
      %c0_32 = arith.constant 0 : index
      %c0_33 = arith.constant 0 : index
      %54 = vector.load %arg6[%c0_32, %c0_33] : memref<8x32xf32, #tpu.memory_space<vmem>>, vector<8x32xf32>
      tpu.vector_store %arg6[%c0_32, %c0_33], %53 {strides = array<i32>} : memref<8x32xf32, #tpu.memory_space<vmem>>, vector<8x32xf32>,
      %c1 = arith.constant 1 : index
      %c0_34 = arith.constant 0 : index
      %c0_35 = arith.constant 0 : index
      %55 = vector.load %arg2[%c1, %c0_34, %c0_35] : memref<2x8x32xf32, #tpu.memory_space<vmem>>, vector<1x8x32xf32>
      %56 = vector.shape_cast %55 : vector<1x8x32xf32> to vector<8x32xf32>
      %c0_36 = arith.constant 0 : index
      %c0_37 = arith.constant 0 : index
      %57 = vector.load %arg7[%c0_36, %c0_37] : memref<8x32xf32, #tpu.memory_space<vmem>>, vector<8x32xf32>
      tpu.vector_store %arg7[%c0_36, %c0_37], %56 {strides = array<i32>} : memref<8x32xf32, #tpu.memory_space<vmem>>, vector<8x32xf32>,
    } else {
    }
    %c0 = arith.constant 0 : index
    %c0_1 = arith.constant 0 : index
    %c0_2 = arith.constant 0 : index
    %3 = vector.load %arg1[%c0, %c0_1, %c0_2] : memref<1x8x32xf32, #tpu.memory_space<vmem>>, vector<1x8x32xf32>
    %4 = vector.shape_cast %3 : vector<1x8x32xf32> to vector<8x32xf32>
    %c0_3 = arith.constant 0 : index
    %c0_4 = arith.constant 0 : index
    %5 = vector.load %arg6[%c0_3, %c0_4] : memref<8x32xf32, #tpu.memory_space<vmem>>, vector<8x32xf32>
    %c0_5 = arith.constant 0 : index
    %c0_6 = arith.constant 0 : index
    %6 = vector.load %arg7[%c0_5, %c0_6] : memref<8x32xf32, #tpu.memory_space<vmem>>, vector<8x32xf32>
    %c0_7 = arith.constant 0 : index
    %c0_8 = arith.constant 0 : index
    %7 = vector.load %arg3[%c0_7, %c0_8] : memref<328x128xf32, #tpu.memory_space<vmem>>, vector<32x128xf32>
    %c32 = arith.constant 32 : index
    %c0_9 = arith.constant 0 : index
    %8 = vector.load %arg3[%c32, %c0_9] : memref<328x128xf32, #tpu.memory_space<vmem>>, vector<128x128xf32>
    %c160 = arith.constant 160 : index
    %c0_10 = arith.constant 0 : index
    %9 = vector.load %arg3[%c160, %c0_10] : memref<328x128xf32, #tpu.memory_space<vmem>>, vector<128x128xf32>
    %c288 = arith.constant 288 : index
    %c0_11 = arith.constant 0 : index
    %10 = vector.load %arg3[%c288, %c0_11] : memref<328x128xf32, #tpu.memory_space<vmem>>, vector<32x128xf32>
    %c320 = arith.constant 320 : index
    %c0_12 = arith.constant 0 : index
    %11 = vector.load %arg3[%c320, %c0_12] : memref<328x128xf32, #tpu.memory_space<vmem>>, vector<1x128xf32>
    %c321 = arith.constant 321 : index
    %c0_13 = arith.constant 0 : index
    %12 = vector.load %arg3[%c321, %c0_13] : memref<328x128xf32, #tpu.memory_space<vmem>>, vector<1x128xf32>
    %c322 = arith.constant 322 : index
    %c0_14 = arith.constant 0 : index
    %13 = vector.load %arg3[%c322, %c0_14] : memref<328x128xf32, #tpu.memory_space<vmem>>, vector<1x128xf32>
    %cst = arith.constant dense<0.000000e+00> : vector<8x128xf32>
    %14 = tpu.matmul %4, %7, %cst {dimension_numbers = #tpu.dot_dimension_numbers<[1], [0], [0], [1], [0, 0, 1, 1], [], []>} : vector<8x32xf32>, vector<32x128xf32>, vector<8x128xf32> -> vector<8x128xf32>
    %15 = vector.broadcast %11 : vector<1x128xf32> to vector<8x128xf32>
    %16 = arith.addf %14, %15 : vector<8x128xf32>
    %cst_15 = arith.constant 0.000000e+00 : f32
    %17 = vector.broadcast %cst_15 : f32 to vector<8x128xf32>
    %18 = arith.maximumf %16, %17 : vector<8x128xf32>
    %cst_16 = arith.constant dense<0.000000e+00> : vector<8x128xf32>
    %19 = tpu.matmul %18, %8, %cst_16 {dimension_numbers = #tpu.dot_dimension_numbers<[1], [0], [0], [1], [0, 0, 1, 1], [], []>} : vector<8x128xf32>, vector<128x128xf32>, vector<8x128xf32> -> vector<8x128xf32>
    %20 = vector.broadcast %12 : vector<1x128xf32> to vector<8x128xf32>
    %21 = arith.addf %19, %20 : vector<8x128xf32>
    %cst_17 = arith.constant 0.000000e+00 : f32
    %22 = vector.broadcast %cst_17 : f32 to vector<8x128xf32>
    %23 = arith.maximumf %21, %22 : vector<8x128xf32>
    %cst_18 = arith.constant dense<0.000000e+00> : vector<8x128xf32>
    %24 = tpu.matmul %23, %9, %cst_18 {dimension_numbers = #tpu.dot_dimension_numbers<[1], [0], [0], [1], [0, 0, 1, 1], [], []>} : vector<8x128xf32>, vector<128x128xf32>, vector<8x128xf32> -> vector<8x128xf32>
    %cst_19 = arith.constant dense<0.000000e+00> : vector<8x128xf32>
    %25 = tpu.matmul %5, %10, %cst_19 {dimension_numbers = #tpu.dot_dimension_numbers<[1], [0], [0], [1], [0, 0, 1, 1], [], []>} : vector<8x32xf32>, vector<32x128xf32>, vector<8x128xf32> -> vector<8x128xf32>
    %26 = arith.addf %24, %25 : vector<8x128xf32>
    %27 = vector.broadcast %13 : vector<1x128xf32> to vector<8x128xf32>
    %28 = arith.addf %26, %27 : vector<8x128xf32>
    %29 = arith.negf %28 : vector<8x128xf32>
    %30 = math.exp %29 : vector<8x128xf32>
    %cst_20 = arith.constant 1.000000e+00 : f32
    %31 = vector.broadcast %cst_20 : f32 to vector<8x128xf32>
    %32 = arith.addf %31, %30 : vector<8x128xf32>
    %33 = arith.divf %31, %32 : vector<8x128xf32>
    %34 = math.tanh %28 : vector<8x128xf32>
    %35 = vector.extract_strided_slice %33 {offsets = [0, 0], sizes = [8, 32], strides = [1, 1]} : vector<8x128xf32> to vector<8x32xf32>
    %36 = vector.extract_strided_slice %33 {offsets = [0, 32], sizes = [8, 32], strides = [1, 1]} : vector<8x128xf32> to vector<8x32xf32>
    %37 = vector.extract_strided_slice %34 {offsets = [0, 64], sizes = [8, 32], strides = [1, 1]} : vector<8x128xf32> to vector<8x32xf32>
    %38 = vector.extract_strided_slice %33 {offsets = [0, 96], sizes = [8, 32], strides = [1, 1]} : vector<8x128xf32> to vector<8x32xf32>
    %39 = arith.mulf %36, %6 : vector<8x32xf32>
    %40 = arith.mulf %35, %37 : vector<8x32xf32>
    %41 = arith.addf %39, %40 : vector<8x32xf32>
    %42 = math.tanh %41 : vector<8x32xf32>
    %43 = arith.mulf %38, %42 : vector<8x32xf32>
    %c0_21 = arith.constant 0 : index
    %c0_22 = arith.constant 0 : index
    %44 = vector.load %arg6[%c0_21, %c0_22] : memref<8x32xf32, #tpu.memory_space<vmem>>, vector<8x32xf32>
    tpu.vector_store %arg6[%c0_21, %c0_22], %43 {strides = array<i32>} : memref<8x32xf32, #tpu.memory_space<vmem>>, vector<8x32xf32>,
    %c0_23 = arith.constant 0 : index
    %c0_24 = arith.constant 0 : index
    %45 = vector.load %arg7[%c0_23, %c0_24] : memref<8x32xf32, #tpu.memory_space<vmem>>, vector<8x32xf32>
    tpu.vector_store %arg7[%c0_23, %c0_24], %41 {strides = array<i32>} : memref<8x32xf32, #tpu.memory_space<vmem>>, vector<8x32xf32>,
    %c0_25 = arith.constant 0 : index
    %c0_26 = arith.constant 0 : index
    %c0_27 = arith.constant 0 : index
    %46 = vector.load %arg4[%c0_25, %c0_26, %c0_27] : memref<1x8x32xf32, #tpu.memory_space<vmem>>, vector<1x8x32xf32>
    %47 = vector.shape_cast %46 : vector<1x8x32xf32> to vector<8x32xf32>
    %48 = vector.shape_cast %43 : vector<8x32xf32> to vector<1x8x32xf32>
    tpu.vector_store %arg4[%c0_25, %c0_26, %c0_27], %48 {strides = array<i32>} : memref<1x8x32xf32, #tpu.memory_space<vmem>>, vector<1x8x32xf32>,
    %c5_i32 = arith.constant 5 : i32
    %49 = arith.cmpi eq, %arg0, %c5_i32 : i32
    %50 = arith.extui %49 : i1 to i32
    %c0_i32_28 = arith.constant 0 : i32
    %51 = arith.cmpi ne, %50, %c0_i32_28 : i32
    scf.if %51 {
      %c0_29 = arith.constant 0 : index
      %c0_30 = arith.constant 0 : index
      %52 = vector.load %arg5[%c0_29, %c0_30] : memref<8x32xf32, #tpu.memory_space<vmem>>, vector<8x32xf32>
      tpu.vector_store %arg5[%c0_29, %c0_30], %41 {strides = array<i32>} : memref<8x32xf32, #tpu.memory_space<vmem>>, vector<8x32xf32>,
    } else {
    }
    return
  }
  func.func @transform_0(%arg0: i32) -> (i32, i32, i32) {
    %c0_i32 = arith.constant 0 : i32
    %c0_i32_0 = arith.constant 0 : i32
    %c0_i32_1 = arith.constant 0 : i32
    return %arg0, %c0_i32, %c0_i32_0 : i32, i32, i32
  }
  func.func @transform_1(%arg0: i32) -> (i32, i32, i32) {
    %c0_i32 = arith.constant 0 : i32
    %c0_i32_0 = arith.constant 0 : i32
    %c0_i32_1 = arith.constant 0 : i32
    %c0_i32_2 = arith.constant 0 : i32
    return %c0_i32, %c0_i32_0, %c0_i32_1 : i32, i32, i32
  }
  func.func @transform_2(%arg0: i32) -> (i32, i32) {
    %c0_i32 = arith.constant 0 : i32
    %c0_i32_0 = arith.constant 0 : i32
    %c0_i32_1 = arith.constant 0 : i32
    return %c0_i32, %c0_i32_0 : i32, i32
  }
  func.func @transform_3(%arg0: i32) -> (i32, i32, i32) {
    %c0_i32 = arith.constant 0 : i32
    %c0_i32_0 = arith.constant 0 : i32
    %c0_i32_1 = arith.constant 0 : i32
    return %arg0, %c0_i32, %c0_i32_0 : i32, i32, i32
  }
  func.func @transform_4(%arg0: i32) -> (i32, i32) {
    %c0_i32 = arith.constant 0 : i32
    %c0_i32_0 = arith.constant 0 : i32
    %c0_i32_1 = arith.constant 0 : i32
    return %c0_i32, %c0_i32_0 : i32, i32
  }
}

</mosaic_0001>

<llo_original>
// kernel: hist_encoder_sequence.1
$region0: #{hist_encoder_sequence.1}
  #allocation0 [shape = 'u32[]', space=smem, size = 0x4, offset = 0x4, fixed_abs, tag = 'smem constant byte address 0x4 - core index']
  #allocation1 [shape = 'u32[144,128]{1,0:T(1,128)}', space=vmem, size = 0x12000, scoped, tag = 'internal scratch']
  #allocation2 [shape = 'f32[8,32]{1,0:T(8,128)}', space=vmem, size = 0x1000, scoped, tag = 'scratch operand']
  #allocation3 [shape = 'f32[8,32]{1,0:T(8,128)}', space=vmem, size = 0x1000, scoped, tag = 'scratch operand']
  %s0 = inlined_call_operand.vmem [shape: f32[6,8,32], index: 0, kind: input, shape index: {}]
  %s1 = inlined_call_operand.vmem [shape: f32[2,8,32], index: 1, kind: input, shape index: {}]
  %s2 = inlined_call_operand.vmem [shape: f32[328,128], index: 2, kind: input, shape index: {}]
  %s3 = inlined_call_operand.vmem [shape: f32[6,8,32], index: 3, kind: output, shape index: {0}]
  %s4 = inlined_call_operand.hbm [shape: f32[8,32], index: 4, kind: output, shape index: {1}]
  %5 = xla_tuple %s3, %s4
  %s6 = sld [smem:[#allocation0]]
  $region61: #{hist_encoder_sequence.1} parent=0
    _
  %s8 = ssub.s32 1, %s6
  %s9 = scalar_select 0, %s8, %s6
  $region1: #{hist_encoder_sequence.1} parent=0
    #allocation4 [shape = 'u8[4096]{0}', space=vmem, size = 0x1000, scoped, tag = 'output window, operand 1, single buffered']
    #allocation5 [shape = 's32[2]{0}', space=sflag, size = 0x8, scoped, tag = 'scoped memory for hist_encoder_sequence.1']
    %10 = vsyncpa [#allocation5], 0
    loop: start=0, step=1, limit=8
    $region2: #{hist_encoder_sequence.1} parent=1 // loop_pre_header
      _
    $region3: #{hist_encoder_sequence.1} parent=1 // loop_header
      %s12 = sphi 0, %s16
      %p13 = scmp.ge.s32.totalorder %s12, 8
      %s22 = sphi 0, %s24
      %s25 = sphi 0, %s22
      %s26 = sphi 0, %s25
      %s42 = sphi 0, %s26
      %s46 = sphi 0, %s46
      %s48 = sphi 0, %s46
      %s49 = sphi 0, %s48
      %s63 = sphi 0, %s49
      %s67 = sphi 0, %s67
      %s69 = sphi 0, %s67
      %s70 = sphi 0, %s69
      %s84 = sphi 0, %s70
      %s90 = sphi 0, %s92
      %s93 = sphi 0, %s90
      %s94 = sphi 0, %s93
      %s110 = sphi 0, %s94
      %s114 = sphi 0, %s114
      %s116 = sphi 0, %s114
      %s117 = sphi 0, %s116
      %s131 = sphi 0, %s117
    $region4: #{hist_encoder_sequence.1} parent=1 // loop_header_branch
      %15 = sbr.rel (%p13) target = $region8
    $region5: #{hist_encoder_sequence.1} parent=1 // loop_body
      %s17 = ssub.s32 %s12, 1
      %s18 = ssub.s32 %s12, 2
      %s19 = sadd.s32 %s12, 1
      %s20 = ssub.s32 %s12, %s19
      %p21 = scmp.eq.s32.totalorder %s20, 0
      %s23 = sadd.s32 %s22, 1
      %s24 = scalar_select %p21, %s22, %s23
      %p27 = pneg %p21
      %p28 = scmp.eq.s32.totalorder %s12, 5
      %p29 = por %p27, %p28
      %p30 = scmp.ne.s32.totalorder %s22, %s25
      %p31 = scmp.eq.s32.totalorder %s12, 0
      %p32 = por %p30, %p31
      %p33 = scmp.ne.s32.totalorder %s22, %s25
      %p34 = scmp.eq.s32.totalorder %s17, 5
      %p35 = por %p33, %p34
      %p36 = scmp.ne.s32.totalorder %s25, %s26
      %p37 = scmp.eq.s32.totalorder %s17, 0
      %p38 = por %p36, %p37
      %p39 = scmp.ne.s32.totalorder %s25, %s26
      %p40 = scmp.eq.s32.totalorder %s18, 5
      %p41 = por %p39, %p40
      %p43 = scmp.ne.s32.totalorder %s26, %s42
      %p44 = scmp.eq.s32.totalorder %s18, 0
      %p45 = por %p43, %p44
      %s47 = sadd.s32 %s46, 1
      %p50 = scmp.eq.s32.totalorder %s12, 5
      %p51 = scmp.ne.s32.totalorder %s46, %s48
      %p52 = scmp.eq.s32.totalorder %s12, 0
      %p53 = por %p51, %p52
      %p54 = scmp.ne.s32.totalorder %s46, %s48
      %p55 = scmp.eq.s32.totalorder %s17, 5
      %p56 = por %p54, %p55
      %p57 = scmp.ne.s32.totalorder %s48, %s49
      %p58 = scmp.eq.s32.totalorder %s17, 0
      %p59 = por %p57, %p58
      %p60 = scmp.ne.s32.totalorder %s48, %s49
      %p61 = scmp.eq.s32.totalorder %s18, 5
      %p62 = por %p60, %p61
      %p64 = scmp.ne.s32.totalorder %s49, %s63
      %p65 = scmp.eq.s32.totalorder %s18, 0
      %p66 = por %p64, %p65
      %s68 = sadd.s32 %s67, 1
      %p71 = scmp.eq.s32.totalorder %s12, 5
      %p72 = scmp.ne.s32.totalorder %s67, %s69
      %p73 = scmp.eq.s32.totalorder %s12, 0
      %p74 = por %p72, %p73
      %p75 = scmp.ne.s32.totalorder %s67, %s69
      %p76 = scmp.eq.s32.totalorder %s17, 5
      %p77 = por %p75, %p76
      %p78 = scmp.ne.s32.totalorder %s69, %s70
      %p79 = scmp.eq.s32.totalorder %s17, 0
      %p80 = por %p78, %p79
      %p81 = scmp.ne.s32.totalorder %s69, %s70
      %p82 = scmp.eq.s32.totalorder %s18, 5
      %p83 = por %p81, %p82
      %p85 = scmp.ne.s32.totalorder %s70, %s84
      %p86 = scmp.eq.s32.totalorder %s18, 0
      %p87 = por %p85, %p86
      %s88 = ssub.s32 %s12, %s19
      %p89 = scmp.eq.s32.totalorder %s88, 0
      %s91 = sadd.s32 %s90, 1
      %s92 = scalar_select %p89, %s90, %s91
      %p95 = pneg %p89
      %p96 = scmp.eq.s32.totalorder %s12, 5
      %p97 = por %p95, %p96
      %p98 = scmp.ne.s32.totalorder %s90, %s93
      %p99 = scmp.eq.s32.totalorder %s12, 0
      %p100 = por %p98, %p99
      %p101 = scmp.ne.s32.totalorder %s90, %s93
      %p102 = scmp.eq.s32.totalorder %s17, 5
      %p103 = por %p101, %p102
      %p104 = scmp.ne.s32.totalorder %s93, %s94
      %p105 = scmp.eq.s32.totalorder %s17, 0
      %p106 = por %p104, %p105
      %p107 = scmp.ne.s32.totalorder %s93, %s94
      %p108 = scmp.eq.s32.totalorder %s18, 5
      %p109 = por %p107, %p108
      %p111 = scmp.ne.s32.totalorder %s94, %s110
      %p112 = scmp.eq.s32.totalorder %s18, 0
      %p113 = por %p111, %p112
      %s115 = sadd.s32 %s114, 1
      %p118 = scmp.eq.s32.totalorder %s12, 5
      %p119 = scmp.ne.s32.totalorder %s114, %s116
      %p120 = scmp.eq.s32.totalorder %s12, 0
      %p121 = por %p119, %p120
      %p122 = scmp.ne.s32.totalorder %s114, %s116
      %p123 = scmp.eq.s32.totalorder %s17, 5
      %p124 = por %p122, %p123
      %p125 = scmp.ne.s32.totalorder %s116, %s117
      %p126 = scmp.eq.s32.totalorder %s17, 0
      %p127 = por %p125, %p126
      %p128 = scmp.ne.s32.totalorder %s116, %s117
      %p129 = scmp.eq.s32.totalorder %s18, 5
      %p130 = por %p128, %p129
      %p132 = scmp.ne.s32.totalorder %s117, %s131
      %p133 = scmp.eq.s32.totalorder %s18, 0
      %p134 = por %p132, %p133
      %p135 = scmp.le.s32.totalorder 1, %s12
      %p136 = scmp.lt.s32.totalorder %s12, 7
      %p137 = pnand %p135, %p136
      %p138 = pneg %p137
      // Predicated region
      $region9: #{hist_encoder_sequence.1} parent=5 // pred_check
        _
      $region10: #{hist_encoder_sequence.1} parent=5 // pred_check_branch
        %140 = sbr.rel (%p137) target = $region12
      $region11: #{hist_encoder_sequence.1} parent=5 // pred_region
        %s141 = ssub.s32 %s12, 1
        // Predicated region
        $region13: #{hist_encoder_sequence.1} parent=11 // pred_check
          %p142 = pneg %p59
        $region14: #{hist_encoder_sequence.1} parent=11 // pred_check_branch
          %144 = sbr.rel (%p142) target = $region16
        $region15: #{hist_encoder_sequence.1} parent=11 // pred_region
          _
        $region16: #{hist_encoder_sequence.1} parent=11 // pred_fallthru
          _
        // Predicated region
        $region17: #{hist_encoder_sequence.1} parent=11 // pred_check
          %p145 = pneg %p80
        $region18: #{hist_encoder_sequence.1} parent=11 // pred_check_branch
          %147 = sbr.rel (%p145) target = $region20
        $region19: #{hist_encoder_sequence.1} parent=11 // pred_region
          _
        $region20: #{hist_encoder_sequence.1} parent=11 // pred_fallthru
          _
      $region12: #{hist_encoder_sequence.1} parent=5 // pred_fallthru
        _
      %p148 = scmp.lt.s32.totalorder %s12, 6
      // Predicated region
      $region21: #{hist_encoder_sequence.1} parent=5 // pred_check
        %p149 = pneg %p148
      $region22: #{hist_encoder_sequence.1} parent=5 // pred_check_branch
        %151 = sbr.rel (%p149) target = $region24
      $region23: #{hist_encoder_sequence.1} parent=5 // pred_region
        // Predicated region
        $region25: #{hist_encoder_sequence.1} parent=23 // pred_check
          %p152 = pneg %p32
        $region26: #{hist_encoder_sequence.1} parent=23 // pred_check_branch
          %154 = sbr.rel (%p152) target = $region28
        $region27: #{hist_encoder_sequence.1} parent=23 // pred_region
          %p155 = scmp.lt.s32.totalorder %s12, 5
          %s156 = scalar_select %p155, %s12, 5
          %s157 = smul.addr %s156, 8
          %s158 = scalar_lea.vmem %s0, %s157
        $region28: #{hist_encoder_sequence.1} parent=23 // pred_fallthru
          _
      $region24: #{hist_encoder_sequence.1} parent=5 // pred_fallthru
        _
      %p159 = scmp.le.s32.totalorder 1, %s12
      %p160 = scmp.lt.s32.totalorder %s12, 7
      %p161 = pnand %p159, %p160
      %p162 = pneg %p161
      // Predicated region
      $region29: #{hist_encoder_sequence.1} parent=5 // pred_check
        _
      $region30: #{hist_encoder_sequence.1} parent=5 // pred_check_branch
        %164 = sbr.rel (%p161) target = $region32
      $region31: #{hist_encoder_sequence.1} parent=5 // pred_region
        %s165 = ssub.s32 %s12, 1
        %p166 = scmp.lt.s32.totalorder %s17, 5
        %s167 = scalar_select %p166, %s17, 5
        %s168 = smul.addr %s167, 8
        %s169 = scalar_lea.vmem %s0, %s168
        %p170 = pneg %p38
        %p171 = pneg %p35
        %p172 = pneg %p59
        %p173 = pneg %p56
        %p174 = pneg %p80
        %p175 = pneg %p77
        %p176 = pneg %p106
        %p177 = pneg %p103
        %p178 = scmp.lt.s32.totalorder %s17, 5
        %s179 = scalar_select %p178, %s17, 5
        %s180 = smul.addr %s179, 8
        %s181 = scalar_lea.vmem %s3, %s180
        %p182 = pneg %p127
        %p183 = pneg %p124
        %p184 = scmp.lt.s32.totalorder %s17, 5
        %s185 = scalar_select %p184, %s17, 5
        %s186 = smul.addr %s185, 8
        %s187 = scalar_lea.vmem %s0, %s186
        %p188 = scmp.lt.s32.totalorder %s17, 5
        %s189 = scalar_select %p188, %s17, 5
        %s190 = smul.addr %s189, 8
        %s191 = scalar_lea.vmem %s3, %s190
        %p192 = scmp.eq.s32.totalorder %s17, 0
        // Predicated region
        $region33: #{hist_encoder_sequence.1} parent=31 // pred_check
          %p193 = pneg %p192
        $region34: #{hist_encoder_sequence.1} parent=31 // pred_check_branch
          %195 = sbr.rel (%p193) target = $region36
        $region35: #{hist_encoder_sequence.1} parent=31 // pred_region
          %v196 = vld [vmem:[%s1] sm:$0xff]
          %vm197 = vcmask 261120
          %198 = vst.msk [vmem:[#allocation2] sm:$0xff] %vm197, %v196
          %s199 = scalar_lea.vmem %s1, 8
          %v200 = vld [vmem:[%s199] sm:$0xff]
          %201 = vst.msk [vmem:[#allocation3] sm:$0xff] %vm197, %v200
        $region36: #{hist_encoder_sequence.1} parent=31 // pred_fallthru
          _
        %v202 = vld [vmem:[%s187] sm:$0xff]
        %v203 = vld [vmem:[#allocation2] sm:$0xff]
        %v204 = vld [vmem:[#allocation3] sm:$0xff]
        %v205 = vld [vmem:[%s2] sm:$0xff]
        %v206 = vld [vmem:[%s2 + $0x8] sm:$0xff]
        %v207 = vld [vmem:[%s2 + $0x10] sm:$0xff]
        %v208 = vld [vmem:[%s2 + $0x18] sm:$0xff]
        %v209 = vld [vmem:[%s2 + $0x20] sm:$0xff]
        %v210 = vld [vmem:[%s2 + $0x28] sm:$0xff]
        %v211 = vld [vmem:[%s2 + $0x30] sm:$0xff]
        %v212 = vld [vmem:[%s2 + $0x38] sm:$0xff]
        %v213 = vld [vmem:[%s2 + $0x40] sm:$0xff]
        %v214 = vld [vmem:[%s2 + $0x48] sm:$0xff]
        %v215 = vld [vmem:[%s2 + $0x50] sm:$0xff]
        %v216 = vld [vmem:[%s2 + $0x58] sm:$0xff]
        %v217 = vld [vmem:[%s2 + $0x60] sm:$0xff]
        %v218 = vld [vmem:[%s2 + $0x68] sm:$0xff]
        %v219 = vld [vmem:[%s2 + $0x70] sm:$0xff]
        %v220 = vld [vmem:[%s2 + $0x78] sm:$0xff]
        %v221 = vld [vmem:[%s2 + $0x80] sm:$0xff]
        %v222 = vld [vmem:[%s2 + $0x88] sm:$0xff]
        %v223 = vld [vmem:[%s2 + $0x90] sm:$0xff]
        %v224 = vld [vmem:[%s2 + $0x98] sm:$0xff]
        %v225 = vld [vmem:[%s2 + $0xa0] sm:$0xff]
        %v226 = vld [vmem:[%s2 + $0xa8] sm:$0xff]
        %v227 = vld [vmem:[%s2 + $0xb0] sm:$0xff]
        %v228 = vld [vmem:[%s2 + $0xb8] sm:$0xff]
        %v229 = vld [vmem:[%s2 + $0xc0] sm:$0xff]
        %v230 = vld [vmem:[%s2 + $0xc8] sm:$0xff]
        %v231 = vld [vmem:[%s2 + $0xd0] sm:$0xff]
        %v232 = vld [vmem:[%s2 + $0xd8] sm:$0xff]
        %v233 = vld [vmem:[%s2 + $0xe0] sm:$0xff]
        %v234 = vld [vmem:[%s2 + $0xe8] sm:$0xff]
        %v235 = vld [vmem:[%s2 + $0xf0] sm:$0xff]
        %v236 = vld [vmem:[%s2 + $0xf8] sm:$0xff]
        %v237 = vld [vmem:[%s2 + $0x100] sm:$0xff]
        %v238 = vld [vmem:[%s2 + $0x108] sm:$0xff]
        %v239 = vld [vmem:[%s2 + $0x110] sm:$0xff]
        %v240 = vld [vmem:[%s2 + $0x118] sm:$0xff]
        %v241 = vld [vmem:[%s2 + $0x120] sm:$0xff]
        %v242 = vld [vmem:[%s2 + $0x128] sm:$0xff]
        %v243 = vld [vmem:[%s2 + $0x130] sm:$0xff]
        %v244 = vld [vmem:[%s2 + $0x138] sm:$0xff]
        %v245 = vld [vmem:[%s2 + $0x140] sm:$0x1]
        %v246 = vld [vmem:[%s2 + $0x141] sm:$0x1]
        %v247 = vld [vmem:[%s2 + $0x142] sm:$0x1]
        %v248 = vlaneseq
        %v249 = vshrl.u32 %v248, 7
        %v250 = vsub.s32 0, %v249
        %v251 = vrot.slane %v245, %v250
        %vm252 = vcmask 261120
        %v254 = vsel %vm252, %v202, 0
        %256 = vmatprep.subr.mxu0 0.0
        %257 = vmatpush1.msra.mxu0 0.0
        %258 = vmatprep.subr.mxu0 0.0
        %259 = vmatpush1.msra.mxu0 0.0
        %260 = vmatprep.subr.mxu0 0.0
        %261 = vmatpush1.msra.mxu0 0.0
        %262 = vmatprep.subr.mxu0 0.0
        %263 = vmatpush1.msra.mxu0 0.0
        %264 = vmatprep.subr.mxu0 0.0
        %265 = vmatpush1.msra.mxu0 0.0
        %266 = vmatprep.subr.mxu0 0.0
        %267 = vmatpush1.msra.mxu0 0.0
        %268 = vmatprep.subr.mxu0 0.0
        %269 = vmatpush1.msra.mxu0 0.0
        %270 = vmatprep.subr.mxu0 0.0
        %271 = vmatpush1.msra.mxu0 0.0
        %272 = vmatprep.subr.mxu0 0.0
        %273 = vmatpush1.msra.mxu0 0.0
        %274 = vmatprep.subr.mxu0 0.0
        %275 = vmatpush1.msra.mxu0 0.0
        %276 = vmatprep.subr.mxu0 0.0
        %277 = vmatpush1.msra.mxu0 0.0
        %278 = vmatprep.subr.mxu0 0.0
        %279 = vmatpush1.msra.mxu0 0.0
        %280 = vmatprep.subr.mxu0 0.0
        %281 = vmatpush1.msra.mxu0 %v208
        %282 = vmatprep.subr.mxu0 0.0
        %283 = vmatpush1.msra.mxu0 %v207
        %284 = vmatprep.subr.mxu0 0.0
        %285 = vmatpush1.msra.mxu0 %v206
        %286 = vmatprep.subr.mxu0 0.0
        %287 = vmatpush1.msra.mxu0 %v205
        %288 = vmatprep.subr.mxu0 0.0
        %289 = vmatpush2.msra.mxu0 0.0
        %290 = vmatprep.subr.mxu0 0.0
        %291 = vmatpush2.msra.mxu0 0.0
        %292 = vmatprep.subr.mxu0 0.0
        %293 = vmatpush2.msra.mxu0 0.0
        %294 = vmatprep.subr.mxu0 0.0
        %295 = vmatpush2.msra.mxu0 0.0
        %296 = vmatprep.subr.mxu0 0.0
        %297 = vmatpush2.msra.mxu0 0.0
        %298 = vmatprep.subr.mxu0 0.0
        %299 = vmatpush2.msra.mxu0 0.0
        %300 = vmatprep.subr.mxu0 0.0
        %301 = vmatpush2.msra.mxu0 0.0
        %302 = vmatprep.subr.mxu0 0.0
        %303 = vmatpush2.msra.mxu0 0.0
        %304 = vmatprep.subr.mxu0 0.0
        %305 = vmatpush2.msra.mxu0 0.0
        %306 = vmatprep.subr.mxu0 0.0
        %307 = vmatpush2.msra.mxu0 0.0
        %308 = vmatprep.subr.mxu0 0.0
        %309 = vmatpush2.msra.mxu0 0.0
        %310 = vmatprep.subr.mxu0 0.0
        %311 = vmatpush2.msra.mxu0 0.0
        %312 = vmatprep.subr.mxu0 0.0
        %313 = vmatpush2.msra.mxu0 0.0
        %314 = vmatprep.subr.mxu0 0.0
        %315 = vmatpush2.msra.mxu0 0.0
        %316 = vmatprep.subr.mxu0 0.0
        %317 = vmatpush2.msra.mxu0 0.0
        %318 = vmatprep.subr.mxu0 0.0
        %319 = vmatpush2.msra.mxu0 0.0
        %320 = vmatprep.mubr.f32.mxu0 0.0
        %321 = vmatmul.mubr.f32.gmra.mxu0 %v254
        %v322 = vpop.f32.mrf.mxu0
        %v323 = vadd.f32 %v251, %v322
        %v324 = vpop.f32.mrf.mxu0
        %325 = vdwg.mxu0
        %v326 = vmax.f32 %v323, 0.0
        %v327 = vlaneseq
        %v328 = vshrl.u32 %v327, 7
        %v329 = vsub.s32 0, %v328
        %v330 = vrot.slane %v246, %v329
        %331 = vmatprep.subr.mxu0 0.0
        %332 = vmatpush1.msra.mxu0 %v224
        %333 = vmatprep.subr.mxu0 0.0
        %334 = vmatpush1.msra.mxu0 %v223
        %335 = vmatprep.subr.mxu0 0.0
        %336 = vmatpush1.msra.mxu0 %v222
        %337 = vmatprep.subr.mxu0 0.0
        %338 = vmatpush1.msra.mxu0 %v221
        %339 = vmatprep.subr.mxu0 0.0
        %340 = vmatpush1.msra.mxu0 %v220
        %341 = vmatprep.subr.mxu0 0.0
        %342 = vmatpush1.msra.mxu0 %v219
        %343 = vmatprep.subr.mxu0 0.0
        %344 = vmatpush1.msra.mxu0 %v218
        %345 = vmatprep.subr.mxu0 0.0
        %346 = vmatpush1.msra.mxu0 %v217
        %347 = vmatprep.subr.mxu0 0.0
        %348 = vmatpush1.msra.mxu0 %v216
        %349 = vmatprep.subr.mxu0 0.0
        %350 = vmatpush1.msra.mxu0 %v215
        %351 = vmatprep.subr.mxu0 0.0
        %352 = vmatpush1.msra.mxu0 %v214
        %353 = vmatprep.subr.mxu0 0.0
        %354 = vmatpush1.msra.mxu0 %v213
        %355 = vmatprep.subr.mxu0 0.0
        %356 = vmatpush1.msra.mxu0 %v212
        %357 = vmatprep.subr.mxu0 0.0
        %358 = vmatpush1.msra.mxu0 %v211
        %359 = vmatprep.subr.mxu0 0.0
        %360 = vmatpush1.msra.mxu0 %v210
        %361 = vmatprep.subr.mxu0 0.0
        %362 = vmatpush1.msra.mxu0 %v209
        %363 = vmatprep.subr.mxu0 0.0
        %364 = vmatpush2.msra.mxu0 0.0
        %365 = vmatprep.subr.mxu0 0.0
        %366 = vmatpush2.msra.mxu0 0.0
        %367 = vmatprep.subr.mxu0 0.0
        %368 = vmatpush2.msra.mxu0 0.0
        %369 = vmatprep.subr.mxu0 0.0
        %370 = vmatpush2.msra.mxu0 0.0
        %371 = vmatprep.subr.mxu0 0.0
        %372 = vmatpush2.msra.mxu0 0.0
        %373 = vmatprep.subr.mxu0 0.0
        %374 = vmatpush2.msra.mxu0 0.0
        %375 = vmatprep.subr.mxu0 0.0
        %376 = vmatpush2.msra.mxu0 0.0
        %377 = vmatprep.subr.mxu0 0.0
        %378 = vmatpush2.msra.mxu0 0.0
        %379 = vmatprep.subr.mxu0 0.0
        %380 = vmatpush2.msra.mxu0 0.0
        %381 = vmatprep.subr.mxu0 0.0
        %382 = vmatpush2.msra.mxu0 0.0
        %383 = vmatprep.subr.mxu0 0.0
        %384 = vmatpush2.msra.mxu0 0.0
        %385 = vmatprep.subr.mxu0 0.0
        %386 = vmatpush2.msra.mxu0 0.0
        %387 = vmatprep.subr.mxu0 0.0
        %388 = vmatpush2.msra.mxu0 0.0
        %389 = vmatprep.subr.mxu0 0.0
        %390 = vmatpush2.msra.mxu0 0.0
        %391 = vmatprep.subr.mxu0 0.0
        %392 = vmatpush2.msra.mxu0 0.0
        %393 = vmatprep.subr.mxu0 0.0
        %394 = vmatpush2.msra.mxu0 0.0
        %395 = vmatprep.mubr.f32.mxu0 0.0
        %396 = vmatmul.mubr.f32.gmra.mxu0 %v326
        %v397 = vpop.f32.mrf.mxu0
        %v398 = vadd.f32 %v330, %v397
        %v399 = vpop.f32.mrf.mxu0
        %400 = vdwg.mxu0
        %v401 = vmax.f32 %v398, 0.0
        %v403 = vsel %vm252, %v203, 0
        %405 = vmatprep.subr.mxu0 0.0
        %406 = vmatpush1.msra.mxu0 0.0
        %407 = vmatprep.subr.mxu0 0.0
        %408 = vmatpush1.msra.mxu0 0.0
        %409 = vmatprep.subr.mxu0 0.0
        %410 = vmatpush1.msra.mxu0 0.0
        %411 = vmatprep.subr.mxu0 0.0
        %412 = vmatpush1.msra.mxu0 0.0
        %413 = vmatprep.subr.mxu0 0.0
        %414 = vmatpush1.msra.mxu0 0.0
        %415 = vmatprep.subr.mxu0 0.0
        %416 = vmatpush1.msra.mxu0 0.0
        %417 = vmatprep.subr.mxu0 0.0
        %418 = vmatpush1.msra.mxu0 0.0
        %419 = vmatprep.subr.mxu0 0.0
        %420 = vmatpush1.msra.mxu0 0.0
        %421 = vmatprep.subr.mxu0 0.0
        %422 = vmatpush1.msra.mxu0 0.0
        %423 = vmatprep.subr.mxu0 0.0
        %424 = vmatpush1.msra.mxu0 0.0
        %425 = vmatprep.subr.mxu0 0.0
        %426 = vmatpush1.msra.mxu0 0.0
        %427 = vmatprep.subr.mxu0 0.0
        %428 = vmatpush1.msra.mxu0 0.0
        %429 = vmatprep.subr.mxu0 0.0
        %430 = vmatpush1.msra.mxu0 %v244
        %431 = vmatprep.subr.mxu0 0.0
        %432 = vmatpush1.msra.mxu0 %v243
        %433 = vmatprep.subr.mxu0 0.0
        %434 = vmatpush1.msra.mxu0 %v242
        %435 = vmatprep.subr.mxu0 0.0
        %436 = vmatpush1.msra.mxu0 %v241
        %437 = vmatprep.subr.mxu0 0.0
        %438 = vmatpush2.msra.mxu0 0.0
        %439 = vmatprep.subr.mxu0 0.0
        %440 = vmatpush2.msra.mxu0 0.0
        %441 = vmatprep.subr.mxu0 0.0
        %442 = vmatpush2.msra.mxu0 0.0
        %443 = vmatprep.subr.mxu0 0.0
        %444 = vmatpush2.msra.mxu0 0.0
        %445 = vmatprep.subr.mxu0 0.0
        %446 = vmatpush2.msra.mxu0 0.0
        %447 = vmatprep.subr.mxu0 0.0
        %448 = vmatpush2.msra.mxu0 0.0
        %449 = vmatprep.subr.mxu0 0.0
        %450 = vmatpush2.msra.mxu0 0.0
        %451 = vmatprep.subr.mxu0 0.0
        %452 = vmatpush2.msra.mxu0 0.0
        %453 = vmatprep.subr.mxu0 0.0
        %454 = vmatpush2.msra.mxu0 0.0
        %455 = vmatprep.subr.mxu0 0.0
        %456 = vmatpush2.msra.mxu0 0.0
        %457 = vmatprep.subr.mxu0 0.0
        %458 = vmatpush2.msra.mxu0 0.0
        %459 = vmatprep.subr.mxu0 0.0
        %460 = vmatpush2.msra.mxu0 0.0
        %461 = vmatprep.subr.mxu0 0.0
        %462 = vmatpush2.msra.mxu0 0.0
        %463 = vmatprep.subr.mxu0 0.0
        %464 = vmatpush2.msra.mxu0 0.0
        %465 = vmatprep.subr.mxu0 0.0
        %466 = vmatpush2.msra.mxu0 0.0
        %467 = vmatprep.subr.mxu0 0.0
        %468 = vmatpush2.msra.mxu0 0.0
        %469 = vmatprep.mubr.f32.mxu0 0.0
        %470 = vmatmul.mubr.f32.gmra.mxu0 %v403
        %v471 = vpop.f32.mrf.mxu0
        %v472 = vadd.f32 0.0, %v471
        %v473 = vpop.f32.mrf.mxu0
        %474 = vdwg.mxu0
        %475 = vmatprep.subr.mxu0 0.0
        %476 = vmatpush1.msra.mxu0 %v240
        %477 = vmatprep.subr.mxu0 0.0
        %478 = vmatpush1.msra.mxu0 %v239
        %479 = vmatprep.subr.mxu0 0.0
        %480 = vmatpush1.msra.mxu0 %v238
        %481 = vmatprep.subr.mxu0 0.0
        %482 = vmatpush1.msra.mxu0 %v237
        %483 = vmatprep.subr.mxu0 0.0
        %484 = vmatpush1.msra.mxu0 %v236
        %485 = vmatprep.subr.mxu0 0.0
        %486 = vmatpush1.msra.mxu0 %v235
        %487 = vmatprep.subr.mxu0 0.0
        %488 = vmatpush1.msra.mxu0 %v234
        %489 = vmatprep.subr.mxu0 0.0
        %490 = vmatpush1.msra.mxu0 %v233
        %491 = vmatprep.subr.mxu0 0.0
        %492 = vmatpush1.msra.mxu0 %v232
        %493 = vmatprep.subr.mxu0 0.0
        %494 = vmatpush1.msra.mxu0 %v231
        %495 = vmatprep.subr.mxu0 0.0
        %496 = vmatpush1.msra.mxu0 %v230
        %497 = vmatprep.subr.mxu0 0.0
        %498 = vmatpush1.msra.mxu0 %v229
        %499 = vmatprep.subr.mxu0 0.0
        %500 = vmatpush1.msra.mxu0 %v228
        %501 = vmatprep.subr.mxu0 0.0
        %502 = vmatpush1.msra.mxu0 %v227
        %503 = vmatprep.subr.mxu0 0.0
        %504 = vmatpush1.msra.mxu0 %v226
        %505 = vmatprep.subr.mxu0 0.0
        %506 = vmatpush1.msra.mxu0 %v225
        %507 = vmatprep.subr.mxu0 0.0
        %508 = vmatpush2.msra.mxu0 0.0
        %509 = vmatprep.subr.mxu0 0.0
        %510 = vmatpush2.msra.mxu0 0.0
        %511 = vmatprep.subr.mxu0 0.0
        %512 = vmatpush2.msra.mxu0 0.0
        %513 = vmatprep.subr.mxu0 0.0
        %514 = vmatpush2.msra.mxu0 0.0
        %515 = vmatprep.subr.mxu0 0.0
        %516 = vmatpush2.msra.mxu0 0.0
        %517 = vmatprep.subr.mxu0 0.0
        %518 = vmatpush2.msra.mxu0 0.0
        %519 = vmatprep.subr.mxu0 0.0
        %520 = vmatpush2.msra.mxu0 0.0
        %521 = vmatprep.subr.mxu0 0.0
        %522 = vmatpush2.msra.mxu0 0.0
        %523 = vmatprep.subr.mxu0 0.0
        %524 = vmatpush2.msra.mxu0 0.0
        %525 = vmatprep.subr.mxu0 0.0
        %526 = vmatpush2.msra.mxu0 0.0
        %527 = vmatprep.subr.mxu0 0.0
        %528 = vmatpush2.msra.mxu0 0.0
        %529 = vmatprep.subr.mxu0 0.0
        %530 = vmatpush2.msra.mxu0 0.0
        %531 = vmatprep.subr.mxu0 0.0
        %532 = vmatpush2.msra.mxu0 0.0
        %533 = vmatprep.subr.mxu0 0.0
        %534 = vmatpush2.msra.mxu0 0.0
        %535 = vmatprep.subr.mxu0 0.0
        %536 = vmatpush2.msra.mxu0 0.0
        %537 = vmatprep.subr.mxu0 0.0
        %538 = vmatpush2.msra.mxu0 0.0
        %539 = vmatprep.mubr.f32.mxu0 0.0
        %540 = vmatmul.mubr.f32.gmra.mxu0 %v401
        %v541 = vpop.f32.mrf.mxu0
        %v542 = vadd.f32 %v472, %v541
        %v543 = vpop.f32.mrf.mxu0
        %544 = vdwg.mxu0
        %v545 = vlaneseq
        %v546 = vshrl.u32 %v545, 7
        %v547 = vsub.s32 0, %v546
        %v548 = vrot.slane %v247, %v547
        %v549 = vadd.f32 %v542, %v548
        %v550 = vxor.u32 %v549, 2147483648
        %v551 = vmul.f32 %v550, 1.442695
        %v552 = vpow.pop %v551
        %v553 = vadd.f32 %v552, 1.0
        %v554 = vrcp.pop %v553
        %v555 = vmul.f32 1.0, %v554
        %v556 = vtanh.pop %v549
        %558 = vrot.lane.b32.xlu0 %v204, 32
        %v559 = vpop.permute.xlu0 %558
        %v561 = vmul.f32 %v555, %v559
        %563 = vrot.lane.b32.xlu0 %v556, 64
        %v564 = vpop.permute.xlu0 %563
        %v566 = vmul.f32 %v555, %v564
        %568 = vrot.lane.b32.xlu0 %v566, 32
        %v569 = vpop.permute.xlu0 %568
        %v571 = vadd.f32 %v561, %v569
        %v572 = vtanh.pop %v571
        %574 = vrot.lane.b32.xlu0 %v572, 64
        %v575 = vpop.permute.xlu0 %574
        %v577 = vmul.f32 %v555, %v575
        %579 = vrot.lane.b32.xlu0 %v577, 32
        %v580 = vpop.permute.xlu0 %579
        %582 = vst.msk [vmem:[#allocation2] sm:$0xff] %vm252, %v580
        %584 = vrot.lane.b32.xlu0 %v571, 96
        %v585 = vpop.permute.xlu0 %584
        %587 = vst.msk [vmem:[#allocation3] sm:$0xff] %vm252, %v585
        %588 = vst.msk [vmem:[%s191] sm:$0xff] %vm252, %v580
        %p589 = scmp.eq.s32.totalorder %s17, 5
        // Predicated region
        $region37: #{hist_encoder_sequence.1} parent=31 // pred_check
          %p590 = pneg %p589
        $region38: #{hist_encoder_sequence.1} parent=31 // pred_check_branch
          %592 = sbr.rel (%p590) target = $region40
        $region39: #{hist_encoder_sequence.1} parent=31 // pred_region
          %593 = vst.msk [vmem:[#allocation4] sm:$0xff] %vm252, %v585
        $region40: #{hist_encoder_sequence.1} parent=31 // pred_fallthru
          _
        %p594 = scmp.lt.s32.totalorder %s17, 5
        %s595 = scalar_select %p594, %s17, 5
        %s596 = smul.addr %s595, 8
        %s597 = scalar_lea.vmem %s3, %s596
        // Predicated region
        $region41: #{hist_encoder_sequence.1} parent=31 // pred_check
          %p598 = pneg %p103
        $region42: #{hist_encoder_sequence.1} parent=31 // pred_check_branch
          %600 = sbr.rel (%p598) target = $region44
        $region43: #{hist_encoder_sequence.1} parent=31 // pred_region
          _
        $region44: #{hist_encoder_sequence.1} parent=31 // pred_fallthru
          _
        // Predicated region
        $region45: #{hist_encoder_sequence.1} parent=31 // pred_check
          %p601 = pneg %p124
        $region46: #{hist_encoder_sequence.1} parent=31 // pred_check_branch
          %603 = sbr.rel (%p601) target = $region48
        $region47: #{hist_encoder_sequence.1} parent=31 // pred_region
          %s605 = ssub.s32 128, 128
          %606 = vsyncadd [#allocation5], %s605
          %s608 = sshll.u32 [#allocation4], 4
          %s609 = int_to_ptr.vmem [resolvable:$true] %s608
          %611 = dma.vmem_to_hbm [thread:$0]  %s609, 128, %s4, [#allocation5]
        $region48: #{hist_encoder_sequence.1} parent=31 // pred_fallthru
          _
        // Predicated region
        $region49: #{hist_encoder_sequence.1} parent=31 // pred_check
          %p612 = pneg %p124
        $region50: #{hist_encoder_sequence.1} parent=31 // pred_check_branch
          %614 = sbr.rel (%p612) target = $region52
        $region51: #{hist_encoder_sequence.1} parent=31 // pred_region
          %615 = dma.done [#allocation5], 128
        $region52: #{hist_encoder_sequence.1} parent=31 // pred_fallthru
          _
      $region32: #{hist_encoder_sequence.1} parent=5 // pred_fallthru
        _
      %p616 = scmp.le.s32.totalorder 2, %s12
      // Predicated region
      $region53: #{hist_encoder_sequence.1} parent=5 // pred_check
        %p617 = pneg %p616
      $region54: #{hist_encoder_sequence.1} parent=5 // pred_check_branch
        %619 = sbr.rel (%p617) target = $region56
      $region55: #{hist_encoder_sequence.1} parent=5 // pred_region
        %s620 = ssub.s32 %s12, 2
        // Predicated region
        $region57: #{hist_encoder_sequence.1} parent=55 // pred_check
          %p621 = pneg %p109
        $region58: #{hist_encoder_sequence.1} parent=55 // pred_check_branch
          %623 = sbr.rel (%p621) target = $region60
        $region59: #{hist_encoder_sequence.1} parent=55 // pred_region
          %p624 = scmp.lt.s32.totalorder %s18, 5
          %s625 = scalar_select %p624, %s18, 5
          %s626 = smul.addr %s625, 8
          %s627 = scalar_lea.vmem %s3, %s626
        $region60: #{hist_encoder_sequence.1} parent=55 // pred_fallthru
          _
      $region56: #{hist_encoder_sequence.1} parent=5 // pred_fallthru
        _
    $region6: #{hist_encoder_sequence.1} parent=1 // loop_footer
      %s16 = sadd.s32 1, %s12
    $region7: #{hist_encoder_sequence.1} parent=1 // loop_footer_branch
      %11 = sbr.rel target = $region3
    $region8: #{hist_encoder_sequence.1} parent=1 // loop_exit
      _
    %628 = vsyncpa [#allocation5], 1
    %s629 = scalar_lea.sflag [#allocation5], 1
    %630 = vsyncpa %s629, 1

</llo_original>
